<compile_context>
chip_gen: v7x
topology: tpu7x:2x2x1
jax: 0.10.0
libtpu: 0.0.40
codegen_flags: <defaults>
</compile_context>

<pallas_src>
import jax
import jax.numpy as jnp
from jax import lax
from jax.experimental import pallas as pl
from jax.experimental.pallas import tpu as pltpu

VOCAB = 1400
HID = 64


def critic_kernel(idx_ref, emb_ref, w1_ref, b1_ref, w2_ref, b2_ref, w3_ref,
                  b3_ref, out_ref):
  """One-hot MXU embedding gather + 3-layer MLP head.

  idx_ref : VMEM i32 [tb, 1]      (x[:, 0].long(), one batch tile)
  emb_ref : VMEM f32 [1400, 64]   (pos_emb.weight, resident whole kernel)
  w1,w2   : VMEM f32 [64, 64]     (fc weights, pre-transposed to [in, out])
  b1,b2   : VMEM f32 [1, 64]
  w3      : VMEM f32 [1, 64]      (state_value weight as a row)
  b3      : SMEM f32 [1]
  out_ref : VMEM f32 [1, tb]      (lane-dense value row for this tile)
  """
  tb = idx_ref.shape[0]

  # TODO(synk): PyTorch's Embedding raises on out-of-range indices; here we
  # clamp instead (add pl.debug_check in interpret/test mode if desired).
  idx = jnp.clip(idx_ref[...], 0, VOCAB - 1)                       # [tb, 1]

  # Embedding gather as a one-hot matmul on the MXU (fully vectorized, no
  # per-row loops, no DMA descriptors).
  vocab_iota = lax.broadcasted_iota(jnp.int32, (tb, VOCAB), 1)     # [tb, V]
  one_hot = (vocab_iota == idx).astype(jnp.float32)                # [tb, V]
  e = jnp.dot(one_hot, emb_ref[...],
              preferred_element_type=jnp.float32)                  # [tb, 64]

  # MLP head (f32 end-to-end, f32 MXU accumulation).
  h1 = jnp.maximum(
      jnp.dot(e, w1_ref[...], preferred_element_type=jnp.float32)
      + b1_ref[...], 0.0)                                          # relu(fc1)
  h2 = jnp.maximum(
      jnp.dot(h1, w2_ref[...], preferred_element_type=jnp.float32)
      + b2_ref[...], 0.0)                                          # relu(fc2)

  # state_value: contract hidden dim of w3_row [1,64] with h2 [tb,64] to get a
  # lane-dense [1, tb] row (unmasked full-lane stores).
  val = lax.dot_general(w3_ref[...], h2, (((1,), (1,)), ((), ())),
                        preferred_element_type=jnp.float32)        # [1, tb]
  out_ref[...] = val + b3_ref[0]


def prepare_params(emb, w1, b1, w2, b2, w3, b3):
  """One-time preprocessing: hoists all layout glue out of the call path."""
  return (emb,                          # [1400, 64]
          jnp.transpose(w1),            # [64, 64]  (in, out)
          b1.reshape(1, HID),
          jnp.transpose(w2),            # [64, 64]
          b2.reshape(1, HID),
          w3.reshape(1, HID),           # state_value weight as a row
          b3.reshape(1,))


def _pick_batch_tile(batch):
  # Overhead-bound at small B: keep the whole batch in one grid step.
  if batch <= 128:
    return batch
  # Large batches: tile at 128 so v7x can shard the grid over both TCs.
  for tb in (128, 64, 32, 16, 8):
    if batch % tb == 0:
      return tb
  return batch


@jax.jit
def critic_forward(x, emb, w1t, b1r, w2t, b2r, w3r, b3s):
  """x: [B, F] float32 (column 0 = position index); returns [B, 1] float32."""
  batch = x.shape[0]
  tb = _pick_batch_tile(batch)
  nb = batch // tb

  # Only remaining per-call glue: fused slice+cast to an index column.
  idx = x[:, :1].astype(jnp.int32)                                 # [B, 1]

  resident = pl.BlockSpec(memory_space=pltpu.MemorySpace.VMEM)     # whole array
  smem = pl.BlockSpec(memory_space=pltpu.MemorySpace.SMEM)

  values = pl.pallas_call(
      critic_kernel,
      out_shape=jax.ShapeDtypeStruct((1, batch), jnp.float32),
      grid=(nb,),
      in_specs=[
          pl.BlockSpec((tb, 1), lambda b: (b, 0)),   # idx (batch-tiled)
          resident,                                  # emb (VMEM-resident)
          resident, resident,                        # w1t, b1r
          resident, resident,                        # w2t, b2r
          resident,                                  # w3r
          smem,                                      # b3 scalar
      ],
      out_specs=pl.BlockSpec((1, tb), lambda b: (0, b)),
      compiler_params=pltpu.CompilerParams(
          dimension_semantics=("parallel",)),
  )(idx, emb, w1t, b1r, w2t, b2r, w3r, b3s)

  return values.reshape(batch, 1)


def init_params(key):
  """Deterministic parameter init (PyTorch default-style)."""
  k = jax.random.split(key, 7)
  emb = jax.random.normal(k[0], (VOCAB, HID), jnp.float32)
  bound = 1.0 / jnp.sqrt(jnp.float32(HID))
  w1 = jax.random.uniform(k[1], (HID, HID), jnp.float32, -bound, bound)
  b1 = jax.random.uniform(k[2], (HID,), jnp.float32, -bound, bound)
  w2 = jax.random.uniform(k[3], (HID, HID), jnp.float32, -bound, bound)
  b2 = jax.random.uniform(k[4], (HID,), jnp.float32, -bound, bound)
  w3 = jax.random.uniform(k[5], (1, HID), jnp.float32, -bound, bound)
  b3 = jax.random.uniform(k[6], (1,), jnp.float32, -bound, bound)
  return emb, w1, b1, w2, b2, w3, b3


def reference_forward(x, emb, w1, b1, w2, b2, w3, b3):
  idx = x[:, 0].astype(jnp.int32)
  e = emb[idx]
  x1 = jax.nn.relu(e @ w1.T + b1)
  x2 = jax.nn.relu(x1 @ w2.T + b2)
  return x2 @ w3.T + b3


if __name__ == "__main__":
  key = jax.random.PRNGKey(0)
  pkey, xkey = jax.random.split(key)

  emb, w1, b1, w2, b2, w3, b3 = init_params(pkey)
  prepared = prepare_params(emb, w1, b1, w2, b2, w3, b3)  # once, off hot path

  # Small deterministic input: batch=8, feature dim F=4; column 0 holds the
  # position index in [0, 1400) (stored as float, like the original tensor).
  B, F = 8, 4
  x = jax.random.uniform(xkey, (B, F), jnp.float32)
  pos = jax.random.randint(jax.random.PRNGKey(1), (B,), 0, VOCAB)
  x = x.at[:, 0].set(pos.astype(jnp.float32))

  value = critic_forward(x, *prepared)
  value = jax.block_until_ready(value)

  ref = reference_forward(x, emb, w1, b1, w2, b2, w3, b3)
  assert value.shape == (B, 1)
  assert jnp.allclose(value, ref, atol=1e-4, rtol=1e-4), (value, ref)

  print("KERNEL_OK")
</pallas_src>

<mosaic_0001>
module attributes {stable_mosaic.version = 11 : i64} {
  func.func @critic_kernel(%arg0: i32, %arg1: memref<8x1xi32, #tpu.memory_space<vmem>>, %arg2: memref<1400x64xf32, #tpu.memory_space<vmem>>, %arg3: memref<64x64xf32, #tpu.memory_space<vmem>>, %arg4: memref<1x64xf32, #tpu.memory_space<vmem>>, %arg5: memref<64x64xf32, #tpu.memory_space<vmem>>, %arg6: memref<1x64xf32, #tpu.memory_space<vmem>>, %arg7: memref<1x64xf32, #tpu.memory_space<vmem>>, %arg8: memref<1xf32, #tpu.memory_space<smem>>, %arg9: memref<1x8xf32, #tpu.memory_space<vmem>>) attributes {dimension_semantics = [#tpu.dimension_semantics<parallel>], iteration_bounds = array<i64: 1>, scalar_prefetch = 0 : i64, scratch_operands = 0 : i64, tpu.core_type = #tpu.core_type<tc>, window_params = [{transform_indices = @transform_0, window_bounds = array<i64: 8, 1>}, {pipeline_mode = #tpu.pipeline_mode<synchronous>, transform_indices = @transform_1, window_bounds = array<i64: 1400, 64>}, {pipeline_mode = #tpu.pipeline_mode<synchronous>, transform_indices = @transform_2, window_bounds = array<i64: 64, 64>}, {pipeline_mode = #tpu.pipeline_mode<synchronous>, transform_indices = @transform_3, window_bounds = array<i64: 1, 64>}, {pipeline_mode = #tpu.pipeline_mode<synchronous>, transform_indices = @transform_4, window_bounds = array<i64: 64, 64>}, {pipeline_mode = #tpu.pipeline_mode<synchronous>, transform_indices = @transform_5, window_bounds = array<i64: 1, 64>}, {pipeline_mode = #tpu.pipeline_mode<synchronous>, transform_indices = @transform_6, window_bounds = array<i64: 1, 64>}, {transform_indices = @transform_7, window_bounds = array<i64: 1>}, {transform_indices = @transform_8, window_bounds = array<i64: 1, 8>}]} {
    %c0 = arith.constant 0 : index
    %c0_0 = arith.constant 0 : index
    %0 = vector.load %arg1[%c0, %c0_0] : memref<8x1xi32, #tpu.memory_space<vmem>>, vector<8x1xi32>
    %c0_i32 = arith.constant 0 : i32
    %c1399_i32 = arith.constant 1399 : i32
    %1 = vector.broadcast %c0_i32 : i32 to vector<8x1xi32>
    %2 = arith.maxsi %1, %0 : vector<8x1xi32>
    %3 = vector.broadcast %c1399_i32 : i32 to vector<8x1xi32>
    %4 = arith.minsi %3, %2 : vector<8x1xi32>
    %5 = tpu.iota {dimensions = array<i32: 1>} : vector<8x1400xi32>
    %6 = vector.broadcast %4 : vector<8x1xi32> to vector<8x1400xi32>
    %7 = arith.cmpi eq, %5, %6 : vector<8x1400xi32>
    %8 = arith.extui %7 : vector<8x1400xi1> to vector<8x1400xi32>
    %9 = arith.sitofp %8 : vector<8x1400xi32> to vector<8x1400xf32>
    %c0_1 = arith.constant 0 : index
    %c0_2 = arith.constant 0 : index
    %10 = vector.load %arg2[%c0_1, %c0_2] : memref<1400x64xf32, #tpu.memory_space<vmem>>, vector<1400x64xf32>
    %cst = arith.constant dense<0.000000e+00> : vector<8x64xf32>
    %11 = tpu.matmul %9, %10, %cst {dimension_numbers = #tpu.dot_dimension_numbers<[1], [0], [0], [1], [0, 0, 1, 1], [], []>} : vector<8x1400xf32>, vector<1400x64xf32>, vector<8x64xf32> -> vector<8x64xf32>
    %c0_3 = arith.constant 0 : index
    %c0_4 = arith.constant 0 : index
    %12 = vector.load %arg3[%c0_3, %c0_4] : memref<64x64xf32, #tpu.memory_space<vmem>>, vector<64x64xf32>
    %cst_5 = arith.constant dense<0.000000e+00> : vector<8x64xf32>
    %13 = tpu.matmul %11, %12, %cst_5 {dimension_numbers = #tpu.dot_dimension_numbers<[1], [0], [0], [1], [0, 0, 1, 1], [], []>} : vector<8x64xf32>, vector<64x64xf32>, vector<8x64xf32> -> vector<8x64xf32>
    %c0_6 = arith.constant 0 : index
    %c0_7 = arith.constant 0 : index
    %14 = vector.load %arg4[%c0_6, %c0_7] : memref<1x64xf32, #tpu.memory_space<vmem>>, vector<1x64xf32>
    %15 = vector.broadcast %14 : vector<1x64xf32> to vector<8x64xf32>
    %16 = arith.addf %13, %15 : vector<8x64xf32>
    %cst_8 = arith.constant 0.000000e+00 : f32
    %17 = vector.broadcast %cst_8 : f32 to vector<8x64xf32>
    %18 = arith.maximumf %16, %17 : vector<8x64xf32>
    %c0_9 = arith.constant 0 : index
    %c0_10 = arith.constant 0 : index
    %19 = vector.load %arg5[%c0_9, %c0_10] : memref<64x64xf32, #tpu.memory_space<vmem>>, vector<64x64xf32>
    %cst_11 = arith.constant dense<0.000000e+00> : vector<8x64xf32>
    %20 = tpu.matmul %18, %19, %cst_11 {dimension_numbers = #tpu.dot_dimension_numbers<[1], [0], [0], [1], [0, 0, 1, 1], [], []>} : vector<8x64xf32>, vector<64x64xf32>, vector<8x64xf32> -> vector<8x64xf32>
    %c0_12 = arith.constant 0 : index
    %c0_13 = arith.constant 0 : index
    %21 = vector.load %arg6[%c0_12, %c0_13] : memref<1x64xf32, #tpu.memory_space<vmem>>, vector<1x64xf32>
    %22 = vector.broadcast %21 : vector<1x64xf32> to vector<8x64xf32>
    %23 = arith.addf %20, %22 : vector<8x64xf32>
    %cst_14 = arith.constant 0.000000e+00 : f32
    %24 = vector.broadcast %cst_14 : f32 to vector<8x64xf32>
    %25 = arith.maximumf %23, %24 : vector<8x64xf32>
    %c0_15 = arith.constant 0 : index
    %c0_16 = arith.constant 0 : index
    %26 = vector.load %arg7[%c0_15, %c0_16] : memref<1x64xf32, #tpu.memory_space<vmem>>, vector<1x64xf32>
    %cst_17 = arith.constant dense<0.000000e+00> : vector<1x8xf32>
    %27 = tpu.matmul %26, %25, %cst_17 {dimension_numbers = #tpu.dot_dimension_numbers<[1], [1], [0], [0], [0, 0, 1, 0], [], []>} : vector<1x64xf32>, vector<8x64xf32>, vector<1x8xf32> -> vector<1x8xf32>
    %c0_18 = arith.constant 0 : index
    %28 = memref.load %arg8[%c0_18] : memref<1xf32, #tpu.memory_space<smem>>
    %29 = vector.broadcast %28 : f32 to vector<1x8xf32>
    %30 = arith.addf %27, %29 : vector<1x8xf32>
    %c0_19 = arith.constant 0 : index
    %c0_20 = arith.constant 0 : index
    %31 = vector.load %arg9[%c0_19, %c0_20] : memref<1x8xf32, #tpu.memory_space<vmem>>, vector<1x8xf32>
    tpu.vector_store %arg9[%c0_19, %c0_20], %30 {strides = array<i32>} : memref<1x8xf32, #tpu.memory_space<vmem>>, vector<1x8xf32>,
    return
  }
  func.func @transform_0(%arg0: i32) -> (i32, i32) {
    %c0_i32 = arith.constant 0 : i32
    %c0_i32_0 = arith.constant 0 : i32
    return %arg0, %c0_i32 : i32, i32
  }
  func.func @transform_1(%arg0: i32) -> (i32, i32) {
    %c0_i32 = arith.constant 0 : i32
    %c0_i32_0 = arith.constant 0 : i32
    %c0_i32_1 = arith.constant 0 : i32
    return %c0_i32, %c0_i32_0 : i32, i32
  }
  func.func @transform_2(%arg0: i32) -> (i32, i32) {
    %c0_i32 = arith.constant 0 : i32
    %c0_i32_0 = arith.constant 0 : i32
    %c0_i32_1 = arith.constant 0 : i32
    return %c0_i32, %c0_i32_0 : i32, i32
  }
  func.func @transform_3(%arg0: i32) -> (i32, i32) {
    %c0_i32 = arith.constant 0 : i32
    %c0_i32_0 = arith.constant 0 : i32
    %c0_i32_1 = arith.constant 0 : i32
    return %c0_i32, %c0_i32_0 : i32, i32
  }
  func.func @transform_4(%arg0: i32) -> (i32, i32) {
    %c0_i32 = arith.constant 0 : i32
    %c0_i32_0 = arith.constant 0 : i32
    %c0_i32_1 = arith.constant 0 : i32
    return %c0_i32, %c0_i32_0 : i32, i32
  }
  func.func @transform_5(%arg0: i32) -> (i32, i32) {
    %c0_i32 = arith.constant 0 : i32
    %c0_i32_0 = arith.constant 0 : i32
    %c0_i32_1 = arith.constant 0 : i32
    return %c0_i32, %c0_i32_0 : i32, i32
  }
  func.func @transform_6(%arg0: i32) -> (i32, i32) {
    %c0_i32 = arith.constant 0 : i32
    %c0_i32_0 = arith.constant 0 : i32
    %c0_i32_1 = arith.constant 0 : i32
    return %c0_i32, %c0_i32_0 : i32, i32
  }
  func.func @transform_7(%arg0: i32) -> i32 {
    %c0_i32 = arith.constant 0 : i32
    %c0_i32_0 = arith.constant 0 : i32
    return %c0_i32 : i32
  }
  func.func @transform_8(%arg0: i32) -> (i32, i32) {
    %c0_i32 = arith.constant 0 : i32
    %c0_i32_0 = arith.constant 0 : i32
    return %c0_i32, %arg0 : i32, i32
  }
}

</mosaic_0001>

<llo_original>
// kernel: critic_forward.1
$region0: #{critic_forward.1}
  #allocation0 [shape = 'u32[]', space=smem, size = 0x4, offset = 0x4, fixed_abs, tag = 'smem constant byte address 0x4 - core index']
  #allocation1 [shape = 'u32[144,128]{1,0:T(1,128)}', space=vmem, size = 0x12000, scoped, tag = 'internal scratch']
  #allocation2 [shape = 'f32[1]{0:T(128)S(6)}', space=smem, size = 0x200, scoped, tag = 'scoped memory for critic_forward.1']
  %s0 = inlined_call_operand.vmem [shape: s32[8,1], index: 0, kind: input, shape index: {}]
  %s1 = inlined_call_operand.vmem [shape: f32[1400,64], index: 1, kind: input, shape index: {}]
  %s2 = inlined_call_operand.vmem [shape: f32[64,64], index: 2, kind: input, shape index: {}]
  %s3 = inlined_call_operand.vmem [shape: f32[1,64], index: 3, kind: input, shape index: {}]
  %s4 = inlined_call_operand.vmem [shape: f32[64,64], index: 4, kind: input, shape index: {}]
  %s5 = inlined_call_operand.vmem [shape: f32[1,64], index: 5, kind: input, shape index: {}]
  %s6 = inlined_call_operand.vmem [shape: f32[1,64], index: 6, kind: input, shape index: {}]
  %s7 = inlined_call_operand.<no memory space> [shape: f32[1], index: 7, kind: input, shape index: {}]
  %s8 = inlined_call_operand.hbm [shape: f32[1,8], index: 8, kind: output, shape index: {}]
  %s9 = sld [smem:[#allocation0]]
  $region42: #{critic_forward.1} parent=0
    _
  %s11 = ssub.s32 1, %s9
  %s12 = scalar_select 0, %s11, %s9
  %13 = sst [smem:[#allocation2]] %s7
  $region1: #{critic_forward.1} parent=0
    #allocation3 [shape = 'u8[512]{0}', space=vmem, size = 0x400, scoped, tag = 'output window, operand 0, single buffered']
    #allocation4 [shape = 's32[1]{0}', space=sflag, size = 0x4, scoped, tag = 'scoped memory for critic_forward.1']
    %14 = vsyncpa [#allocation4], 0
    // Predicated region
    $region2: #{critic_forward.1} parent=1 // pred_check
      _
    $region3: #{critic_forward.1} parent=1 // pred_check_branch
      %16 = sbr.rel (0) target = $region5
    $region4: #{critic_forward.1} parent=1 // pred_region
      _
    $region5: #{critic_forward.1} parent=1 // pred_fallthru
      _
    // Predicated region
    $region6: #{critic_forward.1} parent=1 // pred_check
      _
    $region7: #{critic_forward.1} parent=1 // pred_check_branch
      %18 = sbr.rel (0) target = $region9
    $region8: #{critic_forward.1} parent=1 // pred_region
      _
    $region9: #{critic_forward.1} parent=1 // pred_fallthru
      _
    // Predicated region
    $region10: #{critic_forward.1} parent=1 // pred_check
      _
    $region11: #{critic_forward.1} parent=1 // pred_check_branch
      %20 = sbr.rel (0) target = $region13
    $region12: #{critic_forward.1} parent=1 // pred_region
      _
    $region13: #{critic_forward.1} parent=1 // pred_fallthru
      _
    // Predicated region
    $region14: #{critic_forward.1} parent=1 // pred_check
      _
    $region15: #{critic_forward.1} parent=1 // pred_check_branch
      %22 = sbr.rel (0) target = $region17
    $region16: #{critic_forward.1} parent=1 // pred_region
      _
    $region17: #{critic_forward.1} parent=1 // pred_fallthru
      _
    // Predicated region
    $region18: #{critic_forward.1} parent=1 // pred_check
      _
    $region19: #{critic_forward.1} parent=1 // pred_check_branch
      %24 = sbr.rel (0) target = $region21
    $region20: #{critic_forward.1} parent=1 // pred_region
      _
    $region21: #{critic_forward.1} parent=1 // pred_fallthru
      _
    // Predicated region
    $region22: #{critic_forward.1} parent=1 // pred_check
      _
    $region23: #{critic_forward.1} parent=1 // pred_check_branch
      %26 = sbr.rel (0) target = $region25
    $region24: #{critic_forward.1} parent=1 // pred_region
      _
    $region25: #{critic_forward.1} parent=1 // pred_fallthru
      _
    // Predicated region
    $region26: #{critic_forward.1} parent=1 // pred_check
      _
    $region27: #{critic_forward.1} parent=1 // pred_check_branch
      %28 = sbr.rel (0) target = $region29
    $region28: #{critic_forward.1} parent=1 // pred_region
      _
    $region29: #{critic_forward.1} parent=1 // pred_fallthru
      _
    // Predicated region
    $region30: #{critic_forward.1} parent=1 // pred_check
      _
    $region31: #{critic_forward.1} parent=1 // pred_check_branch
      %30 = sbr.rel (0) target = $region33
    $region32: #{critic_forward.1} parent=1 // pred_region
      _
    $region33: #{critic_forward.1} parent=1 // pred_fallthru
      _
    %v31 = vld [vmem:[%s0] sm:$0xff]
    %vm32 = vcmp.gt.s32.totalorder %v31, 0
    %v33 = vsel %vm32, %v31, 0
    %vm34 = vcmp.lt.s32.totalorder %v33, 1399
    %v35 = vsel %vm34, %v33, 1399
    %v36 = vlaneseq
    %v37 = vand.u32 %v36, 127
    %v38 = vadd.s32 %v37, 128
    %v39 = vadd.s32 %v37, 256
    %v40 = vadd.s32 %v37, 384
    %v41 = vadd.s32 %v37, 512
    %v42 = vadd.s32 %v37, 640
    %v43 = vadd.s32 %v37, 768
    %v44 = vadd.s32 %v37, 896
    %v45 = vadd.s32 %v37, 1024
    %v46 = vadd.s32 %v37, 1152
    %v47 = vadd.s32 %v37, 1280
    %48 = vset.pattern.permute.xlu0 0
    %49 = vperm.xlu0 %48, %v35
    %v50 = vpop.permute.xlu0 %49
    %vm51 = vcmp.eq.s32.totalorder %v37, %v50
    %vm52 = vcmp.eq.s32.totalorder %v38, %v50
    %vm53 = vcmp.eq.s32.totalorder %v39, %v50
    %vm54 = vcmp.eq.s32.totalorder %v40, %v50
    %vm55 = vcmp.eq.s32.totalorder %v41, %v50
    %vm56 = vcmp.eq.s32.totalorder %v42, %v50
    %vm57 = vcmp.eq.s32.totalorder %v43, %v50
    %vm58 = vcmp.eq.s32.totalorder %v44, %v50
    %vm59 = vcmp.eq.s32.totalorder %v45, %v50
    %vm60 = vcmp.eq.s32.totalorder %v46, %v50
    %vm61 = vcmp.eq.s32.totalorder %v47, %v50
    %v62 = vsel %vm51, 1, 0
    %v63 = vsel %vm52, 1, 0
    %v64 = vsel %vm53, 1, 0
    %v65 = vsel %vm54, 1, 0
    %v66 = vsel %vm55, 1, 0
    %v67 = vsel %vm56, 1, 0
    %v68 = vsel %vm57, 1, 0
    %v69 = vsel %vm58, 1, 0
    %v70 = vsel %vm59, 1, 0
    %v71 = vsel %vm60, 1, 0
    %v72 = vsel %vm61, 1, 0
    %v73 = vcvt.s32.f32 %v62
    %v74 = vcvt.s32.f32 %v63
    %v75 = vcvt.s32.f32 %v64
    %v76 = vcvt.s32.f32 %v65
    %v77 = vcvt.s32.f32 %v66
    %v78 = vcvt.s32.f32 %v67
    %v79 = vcvt.s32.f32 %v68
    %v80 = vcvt.s32.f32 %v69
    %v81 = vcvt.s32.f32 %v70
    %v82 = vcvt.s32.f32 %v71
    %v83 = vcvt.s32.f32 %v72
    %v84 = vld [vmem:[%s1] sm:$0xff]
    %v85 = vld [vmem:[%s1 + $0x8] sm:$0xff]
    %v86 = vld [vmem:[%s1 + $0x10] sm:$0xff]
    %v87 = vld [vmem:[%s1 + $0x18] sm:$0xff]
    %v88 = vld [vmem:[%s1 + $0x20] sm:$0xff]
    %v89 = vld [vmem:[%s1 + $0x28] sm:$0xff]
    %v90 = vld [vmem:[%s1 + $0x30] sm:$0xff]
    %v91 = vld [vmem:[%s1 + $0x38] sm:$0xff]
    %v92 = vld [vmem:[%s1 + $0x40] sm:$0xff]
    %v93 = vld [vmem:[%s1 + $0x48] sm:$0xff]
    %v94 = vld [vmem:[%s1 + $0x50] sm:$0xff]
    %v95 = vld [vmem:[%s1 + $0x58] sm:$0xff]
    %v96 = vld [vmem:[%s1 + $0x60] sm:$0xff]
    %v97 = vld [vmem:[%s1 + $0x68] sm:$0xff]
    %v98 = vld [vmem:[%s1 + $0x70] sm:$0xff]
    %v99 = vld [vmem:[%s1 + $0x78] sm:$0xff]
    %v100 = vld [vmem:[%s1 + $0x80] sm:$0xff]
    %v101 = vld [vmem:[%s1 + $0x88] sm:$0xff]
    %v102 = vld [vmem:[%s1 + $0x90] sm:$0xff]
    %v103 = vld [vmem:[%s1 + $0x98] sm:$0xff]
    %v104 = vld [vmem:[%s1 + $0xa0] sm:$0xff]
    %v105 = vld [vmem:[%s1 + $0xa8] sm:$0xff]
    %v106 = vld [vmem:[%s1 + $0xb0] sm:$0xff]
    %v107 = vld [vmem:[%s1 + $0xb8] sm:$0xff]
    %v108 = vld [vmem:[%s1 + $0xc0] sm:$0xff]
    %v109 = vld [vmem:[%s1 + $0xc8] sm:$0xff]
    %v110 = vld [vmem:[%s1 + $0xd0] sm:$0xff]
    %v111 = vld [vmem:[%s1 + $0xd8] sm:$0xff]
    %v112 = vld [vmem:[%s1 + $0xe0] sm:$0xff]
    %v113 = vld [vmem:[%s1 + $0xe8] sm:$0xff]
    %v114 = vld [vmem:[%s1 + $0xf0] sm:$0xff]
    %v115 = vld [vmem:[%s1 + $0xf8] sm:$0xff]
    %v116 = vld [vmem:[%s1 + $0x100] sm:$0xff]
    %v117 = vld [vmem:[%s1 + $0x108] sm:$0xff]
    %v118 = vld [vmem:[%s1 + $0x110] sm:$0xff]
    %v119 = vld [vmem:[%s1 + $0x118] sm:$0xff]
    %v120 = vld [vmem:[%s1 + $0x120] sm:$0xff]
    %v121 = vld [vmem:[%s1 + $0x128] sm:$0xff]
    %v122 = vld [vmem:[%s1 + $0x130] sm:$0xff]
    %v123 = vld [vmem:[%s1 + $0x138] sm:$0xff]
    %v124 = vld [vmem:[%s1 + $0x140] sm:$0xff]
    %v125 = vld [vmem:[%s1 + $0x148] sm:$0xff]
    %v126 = vld [vmem:[%s1 + $0x150] sm:$0xff]
    %v127 = vld [vmem:[%s1 + $0x158] sm:$0xff]
    %v128 = vld [vmem:[%s1 + $0x160] sm:$0xff]
    %v129 = vld [vmem:[%s1 + $0x168] sm:$0xff]
    %v130 = vld [vmem:[%s1 + $0x170] sm:$0xff]
    %v131 = vld [vmem:[%s1 + $0x178] sm:$0xff]
    %v132 = vld [vmem:[%s1 + $0x180] sm:$0xff]
    %v133 = vld [vmem:[%s1 + $0x188] sm:$0xff]
    %v134 = vld [vmem:[%s1 + $0x190] sm:$0xff]
    %v135 = vld [vmem:[%s1 + $0x198] sm:$0xff]
    %v136 = vld [vmem:[%s1 + $0x1a0] sm:$0xff]
    %v137 = vld [vmem:[%s1 + $0x1a8] sm:$0xff]
    %v138 = vld [vmem:[%s1 + $0x1b0] sm:$0xff]
    %v139 = vld [vmem:[%s1 + $0x1b8] sm:$0xff]
    %v140 = vld [vmem:[%s1 + $0x1c0] sm:$0xff]
    %v141 = vld [vmem:[%s1 + $0x1c8] sm:$0xff]
    %v142 = vld [vmem:[%s1 + $0x1d0] sm:$0xff]
    %v143 = vld [vmem:[%s1 + $0x1d8] sm:$0xff]
    %v144 = vld [vmem:[%s1 + $0x1e0] sm:$0xff]
    %v145 = vld [vmem:[%s1 + $0x1e8] sm:$0xff]
    %v146 = vld [vmem:[%s1 + $0x1f0] sm:$0xff]
    %v147 = vld [vmem:[%s1 + $0x1f8] sm:$0xff]
    %v148 = vld [vmem:[%s1 + $0x200] sm:$0xff]
    %v149 = vld [vmem:[%s1 + $0x208] sm:$0xff]
    %v150 = vld [vmem:[%s1 + $0x210] sm:$0xff]
    %v151 = vld [vmem:[%s1 + $0x218] sm:$0xff]
    %v152 = vld [vmem:[%s1 + $0x220] sm:$0xff]
    %v153 = vld [vmem:[%s1 + $0x228] sm:$0xff]
    %v154 = vld [vmem:[%s1 + $0x230] sm:$0xff]
    %v155 = vld [vmem:[%s1 + $0x238] sm:$0xff]
    %v156 = vld [vmem:[%s1 + $0x240] sm:$0xff]
    %v157 = vld [vmem:[%s1 + $0x248] sm:$0xff]
    %v158 = vld [vmem:[%s1 + $0x250] sm:$0xff]
    %v159 = vld [vmem:[%s1 + $0x258] sm:$0xff]
    %v160 = vld [vmem:[%s1 + $0x260] sm:$0xff]
    %v161 = vld [vmem:[%s1 + $0x268] sm:$0xff]
    %v162 = vld [vmem:[%s1 + $0x270] sm:$0xff]
    %v163 = vld [vmem:[%s1 + $0x278] sm:$0xff]
    %v164 = vld [vmem:[%s1 + $0x280] sm:$0xff]
    %v165 = vld [vmem:[%s1 + $0x288] sm:$0xff]
    %v166 = vld [vmem:[%s1 + $0x290] sm:$0xff]
    %v167 = vld [vmem:[%s1 + $0x298] sm:$0xff]
    %v168 = vld [vmem:[%s1 + $0x2a0] sm:$0xff]
    %v169 = vld [vmem:[%s1 + $0x2a8] sm:$0xff]
    %v170 = vld [vmem:[%s1 + $0x2b0] sm:$0xff]
    %v171 = vld [vmem:[%s1 + $0x2b8] sm:$0xff]
    %v172 = vld [vmem:[%s1 + $0x2c0] sm:$0xff]
    %v173 = vld [vmem:[%s1 + $0x2c8] sm:$0xff]
    %v174 = vld [vmem:[%s1 + $0x2d0] sm:$0xff]
    %v175 = vld [vmem:[%s1 + $0x2d8] sm:$0xff]
    %v176 = vld [vmem:[%s1 + $0x2e0] sm:$0xff]
    %v177 = vld [vmem:[%s1 + $0x2e8] sm:$0xff]
    %v178 = vld [vmem:[%s1 + $0x2f0] sm:$0xff]
    %v179 = vld [vmem:[%s1 + $0x2f8] sm:$0xff]
    %v180 = vld [vmem:[%s1 + $0x300] sm:$0xff]
    %v181 = vld [vmem:[%s1 + $0x308] sm:$0xff]
    %v182 = vld [vmem:[%s1 + $0x310] sm:$0xff]
    %v183 = vld [vmem:[%s1 + $0x318] sm:$0xff]
    %v184 = vld [vmem:[%s1 + $0x320] sm:$0xff]
    %v185 = vld [vmem:[%s1 + $0x328] sm:$0xff]
    %v186 = vld [vmem:[%s1 + $0x330] sm:$0xff]
    %v187 = vld [vmem:[%s1 + $0x338] sm:$0xff]
    %v188 = vld [vmem:[%s1 + $0x340] sm:$0xff]
    %v189 = vld [vmem:[%s1 + $0x348] sm:$0xff]
    %v190 = vld [vmem:[%s1 + $0x350] sm:$0xff]
    %v191 = vld [vmem:[%s1 + $0x358] sm:$0xff]
    %v192 = vld [vmem:[%s1 + $0x360] sm:$0xff]
    %v193 = vld [vmem:[%s1 + $0x368] sm:$0xff]
    %v194 = vld [vmem:[%s1 + $0x370] sm:$0xff]
    %v195 = vld [vmem:[%s1 + $0x378] sm:$0xff]
    %v196 = vld [vmem:[%s1 + $0x380] sm:$0xff]
    %v197 = vld [vmem:[%s1 + $0x388] sm:$0xff]
    %v198 = vld [vmem:[%s1 + $0x390] sm:$0xff]
    %v199 = vld [vmem:[%s1 + $0x398] sm:$0xff]
    %v200 = vld [vmem:[%s1 + $0x3a0] sm:$0xff]
    %v201 = vld [vmem:[%s1 + $0x3a8] sm:$0xff]
    %v202 = vld [vmem:[%s1 + $0x3b0] sm:$0xff]
    %v203 = vld [vmem:[%s1 + $0x3b8] sm:$0xff]
    %v204 = vld [vmem:[%s1 + $0x3c0] sm:$0xff]
    %v205 = vld [vmem:[%s1 + $0x3c8] sm:$0xff]
    %v206 = vld [vmem:[%s1 + $0x3d0] sm:$0xff]
    %v207 = vld [vmem:[%s1 + $0x3d8] sm:$0xff]
    %v208 = vld [vmem:[%s1 + $0x3e0] sm:$0xff]
    %v209 = vld [vmem:[%s1 + $0x3e8] sm:$0xff]
    %v210 = vld [vmem:[%s1 + $0x3f0] sm:$0xff]
    %v211 = vld [vmem:[%s1 + $0x3f8] sm:$0xff]
    %v212 = vld [vmem:[%s1 + $0x400] sm:$0xff]
    %v213 = vld [vmem:[%s1 + $0x408] sm:$0xff]
    %v214 = vld [vmem:[%s1 + $0x410] sm:$0xff]
    %v215 = vld [vmem:[%s1 + $0x418] sm:$0xff]
    %v216 = vld [vmem:[%s1 + $0x420] sm:$0xff]
    %v217 = vld [vmem:[%s1 + $0x428] sm:$0xff]
    %v218 = vld [vmem:[%s1 + $0x430] sm:$0xff]
    %v219 = vld [vmem:[%s1 + $0x438] sm:$0xff]
    %v220 = vld [vmem:[%s1 + $0x440] sm:$0xff]
    %v221 = vld [vmem:[%s1 + $0x448] sm:$0xff]
    %v222 = vld [vmem:[%s1 + $0x450] sm:$0xff]
    %v223 = vld [vmem:[%s1 + $0x458] sm:$0xff]
    %v224 = vld [vmem:[%s1 + $0x460] sm:$0xff]
    %v225 = vld [vmem:[%s1 + $0x468] sm:$0xff]
    %v226 = vld [vmem:[%s1 + $0x470] sm:$0xff]
    %v227 = vld [vmem:[%s1 + $0x478] sm:$0xff]
    %v228 = vld [vmem:[%s1 + $0x480] sm:$0xff]
    %v229 = vld [vmem:[%s1 + $0x488] sm:$0xff]
    %v230 = vld [vmem:[%s1 + $0x490] sm:$0xff]
    %v231 = vld [vmem:[%s1 + $0x498] sm:$0xff]
    %v232 = vld [vmem:[%s1 + $0x4a0] sm:$0xff]
    %v233 = vld [vmem:[%s1 + $0x4a8] sm:$0xff]
    %v234 = vld [vmem:[%s1 + $0x4b0] sm:$0xff]
    %v235 = vld [vmem:[%s1 + $0x4b8] sm:$0xff]
    %v236 = vld [vmem:[%s1 + $0x4c0] sm:$0xff]
    %v237 = vld [vmem:[%s1 + $0x4c8] sm:$0xff]
    %v238 = vld [vmem:[%s1 + $0x4d0] sm:$0xff]
    %v239 = vld [vmem:[%s1 + $0x4d8] sm:$0xff]
    %v240 = vld [vmem:[%s1 + $0x4e0] sm:$0xff]
    %v241 = vld [vmem:[%s1 + $0x4e8] sm:$0xff]
    %v242 = vld [vmem:[%s1 + $0x4f0] sm:$0xff]
    %v243 = vld [vmem:[%s1 + $0x4f8] sm:$0xff]
    %v244 = vld [vmem:[%s1 + $0x500] sm:$0xff]
    %v245 = vld [vmem:[%s1 + $0x508] sm:$0xff]
    %v246 = vld [vmem:[%s1 + $0x510] sm:$0xff]
    %v247 = vld [vmem:[%s1 + $0x518] sm:$0xff]
    %v248 = vld [vmem:[%s1 + $0x520] sm:$0xff]
    %v249 = vld [vmem:[%s1 + $0x528] sm:$0xff]
    %v250 = vld [vmem:[%s1 + $0x530] sm:$0xff]
    %v251 = vld [vmem:[%s1 + $0x538] sm:$0xff]
    %v252 = vld [vmem:[%s1 + $0x540] sm:$0xff]
    %v253 = vld [vmem:[%s1 + $0x548] sm:$0xff]
    %v254 = vld [vmem:[%s1 + $0x550] sm:$0xff]
    %v255 = vld [vmem:[%s1 + $0x558] sm:$0xff]
    %v256 = vld [vmem:[%s1 + $0x560] sm:$0xff]
    %v257 = vld [vmem:[%s1 + $0x568] sm:$0xff]
    %v258 = vld [vmem:[%s1 + $0x570] sm:$0xff]
    %vm259 = vcmask 982016
    %v261 = vsel %vm259, %v83, 0
    %263 = vmatprep.subr.mxu0 0.0
    %264 = vmatpush1.msra.mxu0 %v84
    %265 = vmatprep.subr.mxu0 0.0
    %266 = vmatpush1.msra.mxu0 %v85
    %267 = vmatprep.subr.mxu0 0.0
    %268 = vmatpush1.msra.mxu0 %v86
    %269 = vmatprep.subr.mxu0 0.0
    %270 = vmatpush1.msra.mxu0 %v87
    %271 = vmatprep.subr.mxu0 0.0
    %272 = vmatpush1.msra.mxu0 %v88
    %273 = vmatprep.subr.mxu0 0.0
    %274 = vmatpush1.msra.mxu0 %v89
    %275 = vmatprep.subr.mxu0 0.0
    %276 = vmatpush1.msra.mxu0 %v90
    %277 = vmatprep.subr.mxu0 0.0
    %278 = vmatpush1.msra.mxu0 %v91
    %279 = vmatprep.subr.mxu0 0.0
    %280 = vmatpush1.msra.mxu0 %v92
    %281 = vmatprep.subr.mxu0 0.0
    %282 = vmatpush1.msra.mxu0 %v93
    %283 = vmatprep.subr.mxu0 0.0
    %284 = vmatpush1.msra.mxu0 %v94
    %285 = vmatprep.subr.mxu0 0.0
    %286 = vmatpush1.msra.mxu0 %v95
    %287 = vmatprep.subr.mxu0 0.0
    %288 = vmatpush1.msra.mxu0 %v96
    %289 = vmatprep.subr.mxu0 0.0
    %290 = vmatpush1.msra.mxu0 %v97
    %291 = vmatprep.subr.mxu0 0.0
    %292 = vmatpush1.msra.mxu0 %v98
    %293 = vmatprep.subr.mxu0 0.0
    %294 = vmatpush1.msra.mxu0 %v99
    %295 = vmatprep.subr.mxu0 0.0
    %296 = vmatpush1.msra.mxu0 %v100
    %297 = vmatprep.subr.mxu0 0.0
    %298 = vmatpush1.msra.mxu0 %v101
    %299 = vmatprep.subr.mxu0 0.0
    %300 = vmatpush1.msra.mxu0 %v102
    %301 = vmatprep.subr.mxu0 0.0
    %302 = vmatpush1.msra.mxu0 %v103
    %303 = vmatprep.subr.mxu0 0.0
    %304 = vmatpush1.msra.mxu0 %v104
    %305 = vmatprep.subr.mxu0 0.0
    %306 = vmatpush1.msra.mxu0 %v105
    %307 = vmatprep.subr.mxu0 0.0
    %308 = vmatpush1.msra.mxu0 %v106
    %309 = vmatprep.subr.mxu0 0.0
    %310 = vmatpush1.msra.mxu0 %v107
    %311 = vmatprep.subr.mxu0 0.0
    %312 = vmatpush1.msra.mxu0 %v108
    %313 = vmatprep.subr.mxu0 0.0
    %314 = vmatpush1.msra.mxu0 %v109
    %315 = vmatprep.subr.mxu0 0.0
    %316 = vmatpush1.msra.mxu0 %v110
    %317 = vmatprep.subr.mxu0 0.0
    %318 = vmatpush1.msra.mxu0 %v111
    %319 = vmatprep.subr.mxu0 0.0
    %320 = vmatpush1.msra.mxu0 %v112
    %321 = vmatprep.subr.mxu0 0.0
    %322 = vmatpush1.msra.mxu0 %v113
    %323 = vmatprep.subr.mxu0 0.0
    %324 = vmatpush1.msra.mxu0 %v114
    %325 = vmatprep.subr.mxu0 0.0
    %326 = vmatpush1.msra.mxu0 %v115
    %327 = vmatprep.mubr.f32.mxu0 %v74
    %328 = vmatmul.mubr.f32.gmra.mrb[0].mxu0 %v73
    %v329 = vpop.f32.mrb[0].mxu0
    %v330 = vadd.f32 0.0, %v329
    %v331 = vpop.f32.mrb[0].mxu0
    %332 = vdwg.mxu0
    %333 = vmatprep.subr.mxu0 0.0
    %334 = vmatpush1.msra.mxu0 %v116
    %335 = vmatprep.subr.mxu0 0.0
    %336 = vmatpush1.msra.mxu0 %v117
    %337 = vmatprep.subr.mxu0 0.0
    %338 = vmatpush1.msra.mxu0 %v118
    %339 = vmatprep.subr.mxu0 0.0
    %340 = vmatpush1.msra.mxu0 %v119
    %341 = vmatprep.subr.mxu0 0.0
    %342 = vmatpush1.msra.mxu0 %v120
    %343 = vmatprep.subr.mxu0 0.0
    %344 = vmatpush1.msra.mxu0 %v121
    %345 = vmatprep.subr.mxu0 0.0
    %346 = vmatpush1.msra.mxu0 %v122
    %347 = vmatprep.subr.mxu0 0.0
    %348 = vmatpush1.msra.mxu0 %v123
    %349 = vmatprep.subr.mxu0 0.0
    %350 = vmatpush1.msra.mxu0 %v124
    %351 = vmatprep.subr.mxu0 0.0
    %352 = vmatpush1.msra.mxu0 %v125
    %353 = vmatprep.subr.mxu0 0.0
    %354 = vmatpush1.msra.mxu0 %v126
    %355 = vmatprep.subr.mxu0 0.0
    %356 = vmatpush1.msra.mxu0 %v127
    %357 = vmatprep.subr.mxu0 0.0
    %358 = vmatpush1.msra.mxu0 %v128
    %359 = vmatprep.subr.mxu0 0.0
    %360 = vmatpush1.msra.mxu0 %v129
    %361 = vmatprep.subr.mxu0 0.0
    %362 = vmatpush1.msra.mxu0 %v130
    %363 = vmatprep.subr.mxu0 0.0
    %364 = vmatpush1.msra.mxu0 %v131
    %365 = vmatprep.subr.mxu0 0.0
    %366 = vmatpush1.msra.mxu0 %v132
    %367 = vmatprep.subr.mxu0 0.0
    %368 = vmatpush1.msra.mxu0 %v133
    %369 = vmatprep.subr.mxu0 0.0
    %370 = vmatpush1.msra.mxu0 %v134
    %371 = vmatprep.subr.mxu0 0.0
    %372 = vmatpush1.msra.mxu0 %v135
    %373 = vmatprep.subr.mxu0 0.0
    %374 = vmatpush1.msra.mxu0 %v136
    %375 = vmatprep.subr.mxu0 0.0
    %376 = vmatpush1.msra.mxu0 %v137
    %377 = vmatprep.subr.mxu0 0.0
    %378 = vmatpush1.msra.mxu0 %v138
    %379 = vmatprep.subr.mxu0 0.0
    %380 = vmatpush1.msra.mxu0 %v139
    %381 = vmatprep.subr.mxu0 0.0
    %382 = vmatpush1.msra.mxu0 %v140
    %383 = vmatprep.subr.mxu0 0.0
    %384 = vmatpush1.msra.mxu0 %v141
    %385 = vmatprep.subr.mxu0 0.0
    %386 = vmatpush1.msra.mxu0 %v142
    %387 = vmatprep.subr.mxu0 0.0
    %388 = vmatpush1.msra.mxu0 %v143
    %389 = vmatprep.subr.mxu0 0.0
    %390 = vmatpush1.msra.mxu0 %v144
    %391 = vmatprep.subr.mxu0 0.0
    %392 = vmatpush1.msra.mxu0 %v145
    %393 = vmatprep.subr.mxu0 0.0
    %394 = vmatpush1.msra.mxu0 %v146
    %395 = vmatprep.subr.mxu0 0.0
    %396 = vmatpush1.msra.mxu0 %v147
    %397 = vmatprep.mubr.f32.mxu0 %v76
    %398 = vmatmul.mubr.f32.gmra.mrb[0].mxu0 %v75
    %v399 = vpop.f32.mrb[0].mxu0
    %v400 = vadd.f32 %v330, %v399
    %v401 = vpop.f32.mrb[0].mxu0
    %402 = vdwg.mxu0
    %403 = vmatprep.subr.mxu0 0.0
    %404 = vmatpush1.msra.mxu0 %v148
    %405 = vmatprep.subr.mxu0 0.0
    %406 = vmatpush1.msra.mxu0 %v149
    %407 = vmatprep.subr.mxu0 0.0
    %408 = vmatpush1.msra.mxu0 %v150
    %409 = vmatprep.subr.mxu0 0.0
    %410 = vmatpush1.msra.mxu0 %v151
    %411 = vmatprep.subr.mxu0 0.0
    %412 = vmatpush1.msra.mxu0 %v152
    %413 = vmatprep.subr.mxu0 0.0
    %414 = vmatpush1.msra.mxu0 %v153
    %415 = vmatprep.subr.mxu0 0.0
    %416 = vmatpush1.msra.mxu0 %v154
    %417 = vmatprep.subr.mxu0 0.0
    %418 = vmatpush1.msra.mxu0 %v155
    %419 = vmatprep.subr.mxu0 0.0
    %420 = vmatpush1.msra.mxu0 %v156
    %421 = vmatprep.subr.mxu0 0.0
    %422 = vmatpush1.msra.mxu0 %v157
    %423 = vmatprep.subr.mxu0 0.0
    %424 = vmatpush1.msra.mxu0 %v158
    %425 = vmatprep.subr.mxu0 0.0
    %426 = vmatpush1.msra.mxu0 %v159
    %427 = vmatprep.subr.mxu0 0.0
    %428 = vmatpush1.msra.mxu0 %v160
    %429 = vmatprep.subr.mxu0 0.0
    %430 = vmatpush1.msra.mxu0 %v161
    %431 = vmatprep.subr.mxu0 0.0
    %432 = vmatpush1.msra.mxu0 %v162
    %433 = vmatprep.subr.mxu0 0.0
    %434 = vmatpush1.msra.mxu0 %v163
    %435 = vmatprep.subr.mxu0 0.0
    %436 = vmatpush1.msra.mxu0 %v164
    %437 = vmatprep.subr.mxu0 0.0
    %438 = vmatpush1.msra.mxu0 %v165
    %439 = vmatprep.subr.mxu0 0.0
    %440 = vmatpush1.msra.mxu0 %v166
    %441 = vmatprep.subr.mxu0 0.0
    %442 = vmatpush1.msra.mxu0 %v167
    %443 = vmatprep.subr.mxu0 0.0
    %444 = vmatpush1.msra.mxu0 %v168
    %445 = vmatprep.subr.mxu0 0.0
    %446 = vmatpush1.msra.mxu0 %v169
    %447 = vmatprep.subr.mxu0 0.0
    %448 = vmatpush1.msra.mxu0 %v170
    %449 = vmatprep.subr.mxu0 0.0
    %450 = vmatpush1.msra.mxu0 %v171
    %451 = vmatprep.subr.mxu0 0.0
    %452 = vmatpush1.msra.mxu0 %v172
    %453 = vmatprep.subr.mxu0 0.0
    %454 = vmatpush1.msra.mxu0 %v173
    %455 = vmatprep.subr.mxu0 0.0
    %456 = vmatpush1.msra.mxu0 %v174
    %457 = vmatprep.subr.mxu0 0.0
    %458 = vmatpush1.msra.mxu0 %v175
    %459 = vmatprep.subr.mxu0 0.0
    %460 = vmatpush1.msra.mxu0 %v176
    %461 = vmatprep.subr.mxu0 0.0
    %462 = vmatpush1.msra.mxu0 %v177
    %463 = vmatprep.subr.mxu0 0.0
    %464 = vmatpush1.msra.mxu0 %v178
    %465 = vmatprep.subr.mxu0 0.0
    %466 = vmatpush1.msra.mxu0 %v179
    %467 = vmatprep.mubr.f32.mxu0 %v78
    %468 = vmatmul.mubr.f32.gmra.mrb[0].mxu0 %v77
    %v469 = vpop.f32.mrb[0].mxu0
    %v470 = vadd.f32 %v400, %v469
    %v471 = vpop.f32.mrb[0].mxu0
    %472 = vdwg.mxu0
    %473 = vmatprep.subr.mxu0 0.0
    %474 = vmatpush1.msra.mxu0 %v180
    %475 = vmatprep.subr.mxu0 0.0
    %476 = vmatpush1.msra.mxu0 %v181
    %477 = vmatprep.subr.mxu0 0.0
    %478 = vmatpush1.msra.mxu0 %v182
    %479 = vmatprep.subr.mxu0 0.0
    %480 = vmatpush1.msra.mxu0 %v183
    %481 = vmatprep.subr.mxu0 0.0
    %482 = vmatpush1.msra.mxu0 %v184
    %483 = vmatprep.subr.mxu0 0.0
    %484 = vmatpush1.msra.mxu0 %v185
    %485 = vmatprep.subr.mxu0 0.0
    %486 = vmatpush1.msra.mxu0 %v186
    %487 = vmatprep.subr.mxu0 0.0
    %488 = vmatpush1.msra.mxu0 %v187
    %489 = vmatprep.subr.mxu0 0.0
    %490 = vmatpush1.msra.mxu0 %v188
    %491 = vmatprep.subr.mxu0 0.0
    %492 = vmatpush1.msra.mxu0 %v189
    %493 = vmatprep.subr.mxu0 0.0
    %494 = vmatpush1.msra.mxu0 %v190
    %495 = vmatprep.subr.mxu0 0.0
    %496 = vmatpush1.msra.mxu0 %v191
    %497 = vmatprep.subr.mxu0 0.0
    %498 = vmatpush1.msra.mxu0 %v192
    %499 = vmatprep.subr.mxu0 0.0
    %500 = vmatpush1.msra.mxu0 %v193
    %501 = vmatprep.subr.mxu0 0.0
    %502 = vmatpush1.msra.mxu0 %v194
    %503 = vmatprep.subr.mxu0 0.0
    %504 = vmatpush1.msra.mxu0 %v195
    %505 = vmatprep.subr.mxu0 0.0
    %506 = vmatpush1.msra.mxu0 %v196
    %507 = vmatprep.subr.mxu0 0.0
    %508 = vmatpush1.msra.mxu0 %v197
    %509 = vmatprep.subr.mxu0 0.0
    %510 = vmatpush1.msra.mxu0 %v198
    %511 = vmatprep.subr.mxu0 0.0
    %512 = vmatpush1.msra.mxu0 %v199
    %513 = vmatprep.subr.mxu0 0.0
    %514 = vmatpush1.msra.mxu0 %v200
    %515 = vmatprep.subr.mxu0 0.0
    %516 = vmatpush1.msra.mxu0 %v201
    %517 = vmatprep.subr.mxu0 0.0
    %518 = vmatpush1.msra.mxu0 %v202
    %519 = vmatprep.subr.mxu0 0.0
    %520 = vmatpush1.msra.mxu0 %v203
    %521 = vmatprep.subr.mxu0 0.0
    %522 = vmatpush1.msra.mxu0 %v204
    %523 = vmatprep.subr.mxu0 0.0
    %524 = vmatpush1.msra.mxu0 %v205
    %525 = vmatprep.subr.mxu0 0.0
    %526 = vmatpush1.msra.mxu0 %v206
    %527 = vmatprep.subr.mxu0 0.0
    %528 = vmatpush1.msra.mxu0 %v207
    %529 = vmatprep.subr.mxu0 0.0
    %530 = vmatpush1.msra.mxu0 %v208
    %531 = vmatprep.subr.mxu0 0.0
    %532 = vmatpush1.msra.mxu0 %v209
    %533 = vmatprep.subr.mxu0 0.0
    %534 = vmatpush1.msra.mxu0 %v210
    %535 = vmatprep.subr.mxu0 0.0
    %536 = vmatpush1.msra.mxu0 %v211
    %537 = vmatprep.mubr.f32.mxu0 %v80
    %538 = vmatmul.mubr.f32.gmra.mrb[0].mxu0 %v79
    %v539 = vpop.f32.mrb[0].mxu0
    %v540 = vadd.f32 %v470, %v539
    %v541 = vpop.f32.mrb[0].mxu0
    %542 = vdwg.mxu0
    %543 = vmatprep.subr.mxu0 0.0
    %544 = vmatpush1.msra.mxu0 %v212
    %545 = vmatprep.subr.mxu0 0.0
    %546 = vmatpush1.msra.mxu0 %v213
    %547 = vmatprep.subr.mxu0 0.0
    %548 = vmatpush1.msra.mxu0 %v214
    %549 = vmatprep.subr.mxu0 0.0
    %550 = vmatpush1.msra.mxu0 %v215
    %551 = vmatprep.subr.mxu0 0.0
    %552 = vmatpush1.msra.mxu0 %v216
    %553 = vmatprep.subr.mxu0 0.0
    %554 = vmatpush1.msra.mxu0 %v217
    %555 = vmatprep.subr.mxu0 0.0
    %556 = vmatpush1.msra.mxu0 %v218
    %557 = vmatprep.subr.mxu0 0.0
    %558 = vmatpush1.msra.mxu0 %v219
    %559 = vmatprep.subr.mxu0 0.0
    %560 = vmatpush1.msra.mxu0 %v220
    %561 = vmatprep.subr.mxu0 0.0
    %562 = vmatpush1.msra.mxu0 %v221
    %563 = vmatprep.subr.mxu0 0.0
    %564 = vmatpush1.msra.mxu0 %v222
    %565 = vmatprep.subr.mxu0 0.0
    %566 = vmatpush1.msra.mxu0 %v223
    %567 = vmatprep.subr.mxu0 0.0
    %568 = vmatpush1.msra.mxu0 %v224
    %569 = vmatprep.subr.mxu0 0.0
    %570 = vmatpush1.msra.mxu0 %v225
    %571 = vmatprep.subr.mxu0 0.0
    %572 = vmatpush1.msra.mxu0 %v226
    %573 = vmatprep.subr.mxu0 0.0
    %574 = vmatpush1.msra.mxu0 %v227
    %575 = vmatprep.subr.mxu0 0.0
    %576 = vmatpush1.msra.mxu0 %v228
    %577 = vmatprep.subr.mxu0 0.0
    %578 = vmatpush1.msra.mxu0 %v229
    %579 = vmatprep.subr.mxu0 0.0
    %580 = vmatpush1.msra.mxu0 %v230
    %581 = vmatprep.subr.mxu0 0.0
    %582 = vmatpush1.msra.mxu0 %v231
    %583 = vmatprep.subr.mxu0 0.0
    %584 = vmatpush1.msra.mxu0 %v232
    %585 = vmatprep.subr.mxu0 0.0
    %586 = vmatpush1.msra.mxu0 %v233
    %587 = vmatprep.subr.mxu0 0.0
    %588 = vmatpush1.msra.mxu0 %v234
    %589 = vmatprep.subr.mxu0 0.0
    %590 = vmatpush1.msra.mxu0 %v235
    %591 = vmatprep.subr.mxu0 0.0
    %592 = vmatpush1.msra.mxu0 %v236
    %593 = vmatprep.subr.mxu0 0.0
    %594 = vmatpush1.msra.mxu0 %v237
    %595 = vmatprep.subr.mxu0 0.0
    %596 = vmatpush1.msra.mxu0 %v238
    %597 = vmatprep.subr.mxu0 0.0
    %598 = vmatpush1.msra.mxu0 %v239
    %599 = vmatprep.subr.mxu0 0.0
    %600 = vmatpush1.msra.mxu0 %v240
    %601 = vmatprep.subr.mxu0 0.0
    %602 = vmatpush1.msra.mxu0 %v241
    %603 = vmatprep.subr.mxu0 0.0
    %604 = vmatpush1.msra.mxu0 %v242
    %605 = vmatprep.subr.mxu0 0.0
    %606 = vmatpush1.msra.mxu0 %v243
    %607 = vmatprep.mubr.f32.mxu0 %v82
    %608 = vmatmul.mubr.f32.gmra.mrb[0].mxu0 %v81
    %v609 = vpop.f32.mrb[0].mxu0
    %v610 = vadd.f32 %v540, %v609
    %v611 = vpop.f32.mrb[0].mxu0
    %612 = vdwg.mxu0
    %613 = vmatprep.subr.mxu0 0.0
    %614 = vmatpush1.msra.mxu0 %v244
    %615 = vmatprep.subr.mxu0 0.0
    %616 = vmatpush1.msra.mxu0 %v245
    %617 = vmatprep.subr.mxu0 0.0
    %618 = vmatpush1.msra.mxu0 %v246
    %619 = vmatprep.subr.mxu0 0.0
    %620 = vmatpush1.msra.mxu0 %v247
    %621 = vmatprep.subr.mxu0 0.0
    %622 = vmatpush1.msra.mxu0 %v248
    %623 = vmatprep.subr.mxu0 0.0
    %624 = vmatpush1.msra.mxu0 %v249
    %625 = vmatprep.subr.mxu0 0.0
    %626 = vmatpush1.msra.mxu0 %v250
    %627 = vmatprep.subr.mxu0 0.0
    %628 = vmatpush1.msra.mxu0 %v251
    %629 = vmatprep.subr.mxu0 0.0
    %630 = vmatpush1.msra.mxu0 %v252
    %631 = vmatprep.subr.mxu0 0.0
    %632 = vmatpush1.msra.mxu0 %v253
    %633 = vmatprep.subr.mxu0 0.0
    %634 = vmatpush1.msra.mxu0 %v254
    %635 = vmatprep.subr.mxu0 0.0
    %636 = vmatpush1.msra.mxu0 %v255
    %637 = vmatprep.subr.mxu0 0.0
    %638 = vmatpush1.msra.mxu0 %v256
    %639 = vmatprep.subr.mxu0 0.0
    %640 = vmatpush1.msra.mxu0 %v257
    %641 = vmatprep.subr.mxu0 0.0
    %642 = vmatpush1.msra.mxu0 %v258
    %643 = vmatprep.subr.mxu0 0.0
    %644 = vmatpush1.msra.mxu0 0.0
    %645 = vmatprep.subr.mxu0 0.0
    %646 = vmatpush1.msra.mxu0 0.0
    %647 = vmatprep.subr.mxu0 0.0
    %648 = vmatpush1.msra.mxu0 0.0
    %649 = vmatprep.subr.mxu0 0.0
    %650 = vmatpush1.msra.mxu0 0.0
    %651 = vmatprep.subr.mxu0 0.0
    %652 = vmatpush1.msra.mxu0 0.0
    %653 = vmatprep.subr.mxu0 0.0
    %654 = vmatpush1.msra.mxu0 0.0
    %655 = vmatprep.subr.mxu0 0.0
    %656 = vmatpush1.msra.mxu0 0.0
    %657 = vmatprep.subr.mxu0 0.0
    %658 = vmatpush1.msra.mxu0 0.0
    %659 = vmatprep.subr.mxu0 0.0
    %660 = vmatpush1.msra.mxu0 0.0
    %661 = vmatprep.subr.mxu0 0.0
    %662 = vmatpush1.msra.mxu0 0.0
    %663 = vmatprep.subr.mxu0 0.0
    %664 = vmatpush1.msra.mxu0 0.0
    %665 = vmatprep.subr.mxu0 0.0
    %666 = vmatpush1.msra.mxu0 0.0
    %667 = vmatprep.subr.mxu0 0.0
    %668 = vmatpush1.msra.mxu0 0.0
    %669 = vmatprep.subr.mxu0 0.0
    %670 = vmatpush1.msra.mxu0 0.0
    %671 = vmatprep.subr.mxu0 0.0
    %672 = vmatpush1.msra.mxu0 0.0
    %673 = vmatprep.subr.mxu0 0.0
    %674 = vmatpush1.msra.mxu0 0.0
    %675 = vmatprep.subr.mxu0 0.0
    %676 = vmatpush1.msra.mxu0 0.0
    %677 = vmatprep.mubr.f32.mxu0 0.0
    %678 = vmatmul.mubr.f32.gmra.mrb[0].mxu0 %v261
    %v679 = vpop.f32.mrb[0].mxu0
    %v680 = vadd.f32 %v610, %v679
    %v681 = vpop.f32.mrb[0].mxu0
    %682 = vdwg.mxu0
    %v683 = vld [vmem:[%s2] sm:$0xff]
    %v684 = vld [vmem:[%s2 + $0x8] sm:$0xff]
    %v685 = vld [vmem:[%s2 + $0x10] sm:$0xff]
    %v686 = vld [vmem:[%s2 + $0x18] sm:$0xff]
    %v687 = vld [vmem:[%s2 + $0x20] sm:$0xff]
    %v688 = vld [vmem:[%s2 + $0x28] sm:$0xff]
    %v689 = vld [vmem:[%s2 + $0x30] sm:$0xff]
    %v690 = vld [vmem:[%s2 + $0x38] sm:$0xff]
    %v691 = vld [vmem:[%s3] sm:$0x1]
    %v693 = vlaneseq
    %v694 = vshrl.u32 %v693, 7
    %v695 = vsub.s32 0, %v694
    %v696 = vrot.slane %v691, %v695
    %vm698 = vcmask 523264
    %v700 = vsel %vm698, %v680, 0
    %702 = vmatprep.subr.mxu0 0.0
    %703 = vmatpush1.msra.mxu0 %v683
    %704 = vmatprep.subr.mxu0 0.0
    %705 = vmatpush1.msra.mxu0 %v684
    %706 = vmatprep.subr.mxu0 0.0
    %707 = vmatpush1.msra.mxu0 %v685
    %708 = vmatprep.subr.mxu0 0.0
    %709 = vmatpush1.msra.mxu0 %v686
    %710 = vmatprep.subr.mxu0 0.0
    %711 = vmatpush1.msra.mxu0 %v687
    %712 = vmatprep.subr.mxu0 0.0
    %713 = vmatpush1.msra.mxu0 %v688
    %714 = vmatprep.subr.mxu0 0.0
    %715 = vmatpush1.msra.mxu0 %v689
    %716 = vmatprep.subr.mxu0 0.0
    %717 = vmatpush1.msra.mxu0 %v690
    %718 = vmatprep.subr.mxu0 0.0
    %719 = vmatpush1.msra.mxu0 0.0
    %720 = vmatprep.subr.mxu0 0.0
    %721 = vmatpush1.msra.mxu0 0.0
    %722 = vmatprep.subr.mxu0 0.0
    %723 = vmatpush1.msra.mxu0 0.0
    %724 = vmatprep.subr.mxu0 0.0
    %725 = vmatpush1.msra.mxu0 0.0
    %726 = vmatprep.subr.mxu0 0.0
    %727 = vmatpush1.msra.mxu0 0.0
    %728 = vmatprep.subr.mxu0 0.0
    %729 = vmatpush1.msra.mxu0 0.0
    %730 = vmatprep.subr.mxu0 0.0
    %731 = vmatpush1.msra.mxu0 0.0
    %732 = vmatprep.subr.mxu0 0.0
    %733 = vmatpush1.msra.mxu0 0.0
    %734 = vmatprep.subr.mxu0 0.0
    %735 = vmatpush1.msra.mxu0 0.0
    %736 = vmatprep.subr.mxu0 0.0
    %737 = vmatpush1.msra.mxu0 0.0
    %738 = vmatprep.subr.mxu0 0.0
    %739 = vmatpush1.msra.mxu0 0.0
    %740 = vmatprep.subr.mxu0 0.0
    %741 = vmatpush1.msra.mxu0 0.0
    %742 = vmatprep.subr.mxu0 0.0
    %743 = vmatpush1.msra.mxu0 0.0
    %744 = vmatprep.subr.mxu0 0.0
    %745 = vmatpush1.msra.mxu0 0.0
    %746 = vmatprep.subr.mxu0 0.0
    %747 = vmatpush1.msra.mxu0 0.0
    %748 = vmatprep.subr.mxu0 0.0
    %749 = vmatpush1.msra.mxu0 0.0
    %750 = vmatprep.subr.mxu0 0.0
    %751 = vmatpush1.msra.mxu0 0.0
    %752 = vmatprep.subr.mxu0 0.0
    %753 = vmatpush1.msra.mxu0 0.0
    %754 = vmatprep.subr.mxu0 0.0
    %755 = vmatpush1.msra.mxu0 0.0
    %756 = vmatprep.subr.mxu0 0.0
    %757 = vmatpush1.msra.mxu0 0.0
    %758 = vmatprep.subr.mxu0 0.0
    %759 = vmatpush1.msra.mxu0 0.0
    %760 = vmatprep.subr.mxu0 0.0
    %761 = vmatpush1.msra.mxu0 0.0
    %762 = vmatprep.subr.mxu0 0.0
    %763 = vmatpush1.msra.mxu0 0.0
    %764 = vmatprep.subr.mxu0 0.0
    %765 = vmatpush1.msra.mxu0 0.0
    %766 = vmatprep.mubr.f32.mxu0 0.0
    %767 = vmatmul.mubr.f32.gmra.mrb[0].mxu0 %v700
    %v768 = vpop.f32.mrb[0].mxu0
    %v769 = vadd.f32 %v696, %v768
    %v770 = vpop.f32.mrb[0].mxu0
    %771 = vdwg.mxu0
    %v772 = vmax.f32 %v769, 0.0
    %v773 = vld [vmem:[%s4] sm:$0xff]
    %v774 = vld [vmem:[%s4 + $0x8] sm:$0xff]
    %v775 = vld [vmem:[%s4 + $0x10] sm:$0xff]
    %v776 = vld [vmem:[%s4 + $0x18] sm:$0xff]
    %v777 = vld [vmem:[%s4 + $0x20] sm:$0xff]
    %v778 = vld [vmem:[%s4 + $0x28] sm:$0xff]
    %v779 = vld [vmem:[%s4 + $0x30] sm:$0xff]
    %v780 = vld [vmem:[%s4 + $0x38] sm:$0xff]
    %v781 = vld [vmem:[%s5] sm:$0x1]
    %v783 = vlaneseq
    %v784 = vshrl.u32 %v783, 7
    %v785 = vsub.s32 0, %v784
    %v786 = vrot.slane %v781, %v785
    %v789 = vsel %vm698, %v772, 0
    %791 = vmatprep.subr.mxu0 0.0
    %792 = vmatpush1.msra.mxu0 %v773
    %793 = vmatprep.subr.mxu0 0.0
    %794 = vmatpush1.msra.mxu0 %v774
    %795 = vmatprep.subr.mxu0 0.0
    %796 = vmatpush1.msra.mxu0 %v775
    %797 = vmatprep.subr.mxu0 0.0
    %798 = vmatpush1.msra.mxu0 %v776
    %799 = vmatprep.subr.mxu0 0.0
    %800 = vmatpush1.msra.mxu0 %v777
    %801 = vmatprep.subr.mxu0 0.0
    %802 = vmatpush1.msra.mxu0 %v778
    %803 = vmatprep.subr.mxu0 0.0
    %804 = vmatpush1.msra.mxu0 %v779
    %805 = vmatprep.subr.mxu0 0.0
    %806 = vmatpush1.msra.mxu0 %v780
    %807 = vmatprep.subr.mxu0 0.0
    %808 = vmatpush1.msra.mxu0 0.0
    %809 = vmatprep.subr.mxu0 0.0
    %810 = vmatpush1.msra.mxu0 0.0
    %811 = vmatprep.subr.mxu0 0.0
    %812 = vmatpush1.msra.mxu0 0.0
    %813 = vmatprep.subr.mxu0 0.0
    %814 = vmatpush1.msra.mxu0 0.0
    %815 = vmatprep.subr.mxu0 0.0
    %816 = vmatpush1.msra.mxu0 0.0
    %817 = vmatprep.subr.mxu0 0.0
    %818 = vmatpush1.msra.mxu0 0.0
    %819 = vmatprep.subr.mxu0 0.0
    %820 = vmatpush1.msra.mxu0 0.0
    %821 = vmatprep.subr.mxu0 0.0
    %822 = vmatpush1.msra.mxu0 0.0
    %823 = vmatprep.subr.mxu0 0.0
    %824 = vmatpush1.msra.mxu0 0.0
    %825 = vmatprep.subr.mxu0 0.0
    %826 = vmatpush1.msra.mxu0 0.0
    %827 = vmatprep.subr.mxu0 0.0
    %828 = vmatpush1.msra.mxu0 0.0
    %829 = vmatprep.subr.mxu0 0.0
    %830 = vmatpush1.msra.mxu0 0.0
    %831 = vmatprep.subr.mxu0 0.0
    %832 = vmatpush1.msra.mxu0 0.0
    %833 = vmatprep.subr.mxu0 0.0
    %834 = vmatpush1.msra.mxu0 0.0
    %835 = vmatprep.subr.mxu0 0.0
    %836 = vmatpush1.msra.mxu0 0.0
    %837 = vmatprep.subr.mxu0 0.0
    %838 = vmatpush1.msra.mxu0 0.0
    %839 = vmatprep.subr.mxu0 0.0
    %840 = vmatpush1.msra.mxu0 0.0
    %841 = vmatprep.subr.mxu0 0.0
    %842 = vmatpush1.msra.mxu0 0.0
    %843 = vmatprep.subr.mxu0 0.0
    %844 = vmatpush1.msra.mxu0 0.0
    %845 = vmatprep.subr.mxu0 0.0
    %846 = vmatpush1.msra.mxu0 0.0
    %847 = vmatprep.subr.mxu0 0.0
    %848 = vmatpush1.msra.mxu0 0.0
    %849 = vmatprep.subr.mxu0 0.0
    %850 = vmatpush1.msra.mxu0 0.0
    %851 = vmatprep.subr.mxu0 0.0
    %852 = vmatpush1.msra.mxu0 0.0
    %853 = vmatprep.subr.mxu0 0.0
    %854 = vmatpush1.msra.mxu0 0.0
    %855 = vmatprep.mubr.f32.mxu0 0.0
    %856 = vmatmul.mubr.f32.gmra.mrb[0].mxu0 %v789
    %v857 = vpop.f32.mrb[0].mxu0
    %v858 = vadd.f32 %v786, %v857
    %v859 = vpop.f32.mrb[0].mxu0
    %860 = vdwg.mxu0
    %v861 = vmax.f32 %v858, 0.0
    %v862 = vld [vmem:[%s6] sm:$0x1]
    %s863 = sld [smem:[#allocation2]]
    %v864 = vstv %s863
    %v866 = vsel %vm698, %v862, 0
    %v869 = vsel %vm698, %v861, 0
    %871 = vmatprep.subr.mxu0 0.0
    %872 = vmatpush1.xpose.msra.mxu0 %v869
    %873 = vmatprep.subr.mxu0 0.0
    %874 = vmatpush1.xpose.msra.mxu0 0.0
    %875 = vmatprep.subr.mxu0 0.0
    %876 = vmatpush1.xpose.msra.mxu0 0.0
    %877 = vmatprep.subr.mxu0 0.0
    %878 = vmatpush1.xpose.msra.mxu0 0.0
    %879 = vmatprep.subr.mxu0 0.0
    %880 = vmatpush1.xpose.msra.mxu0 0.0
    %881 = vmatprep.subr.mxu0 0.0
    %882 = vmatpush1.xpose.msra.mxu0 0.0
    %883 = vmatprep.subr.mxu0 0.0
    %884 = vmatpush1.xpose.msra.mxu0 0.0
    %885 = vmatprep.subr.mxu0 0.0
    %886 = vmatpush1.xpose.msra.mxu0 0.0
    %887 = vmatprep.subr.mxu0 0.0
    %888 = vmatpush1.xpose.msra.mxu0 0.0
    %889 = vmatprep.subr.mxu0 0.0
    %890 = vmatpush1.xpose.msra.mxu0 0.0
    %891 = vmatprep.subr.mxu0 0.0
    %892 = vmatpush1.xpose.msra.mxu0 0.0
    %893 = vmatprep.subr.mxu0 0.0
    %894 = vmatpush1.xpose.msra.mxu0 0.0
    %895 = vmatprep.subr.mxu0 0.0
    %896 = vmatpush1.xpose.msra.mxu0 0.0
    %897 = vmatprep.subr.mxu0 0.0
    %898 = vmatpush1.xpose.msra.mxu0 0.0
    %899 = vmatprep.subr.mxu0 0.0
    %900 = vmatpush1.xpose.msra.mxu0 0.0
    %901 = vmatprep.subr.mxu0 0.0
    %902 = vmatpush1.xpose.msra.mxu0 0.0
    %903 = vmatprep.subr.mxu0 0.0
    %904 = vmatpush1.xpose.msra.mxu0 0.0
    %905 = vmatprep.subr.mxu0 0.0
    %906 = vmatpush1.xpose.msra.mxu0 0.0
    %907 = vmatprep.subr.mxu0 0.0
    %908 = vmatpush1.xpose.msra.mxu0 0.0
    %909 = vmatprep.subr.mxu0 0.0
    %910 = vmatpush1.xpose.msra.mxu0 0.0
    %911 = vmatprep.subr.mxu0 0.0
    %912 = vmatpush1.xpose.msra.mxu0 0.0
    %913 = vmatprep.subr.mxu0 0.0
    %914 = vmatpush1.xpose.msra.mxu0 0.0
    %915 = vmatprep.subr.mxu0 0.0
    %916 = vmatpush1.xpose.msra.mxu0 0.0
    %917 = vmatprep.subr.mxu0 0.0
    %918 = vmatpush1.xpose.msra.mxu0 0.0
    %919 = vmatprep.subr.mxu0 0.0
    %920 = vmatpush1.xpose.msra.mxu0 0.0
    %921 = vmatprep.subr.mxu0 0.0
    %922 = vmatpush1.xpose.msra.mxu0 0.0
    %923 = vmatprep.subr.mxu0 0.0
    %924 = vmatpush1.xpose.msra.mxu0 0.0
    %925 = vmatprep.subr.mxu0 0.0
    %926 = vmatpush1.xpose.msra.mxu0 0.0
    %927 = vmatprep.subr.mxu0 0.0
    %928 = vmatpush1.xpose.msra.mxu0 0.0
    %929 = vmatprep.subr.mxu0 0.0
    %930 = vmatpush1.xpose.msra.mxu0 0.0
    %931 = vmatprep.subr.mxu0 0.0
    %932 = vmatpush1.xpose.msra.mxu0 0.0
    %933 = vmatprep.subr.mxu0 0.0
    %934 = vmatpush1.xpose.msra.mxu0 0.0
    %935 = vmatprep.mubr.f32.mxu0 0.0
    %936 = vmatmul.mubr.f32.gmra.mrb[0].mxu0 %v866
    %v937 = vpop.f32.mrb[0].mxu0
    %v938 = vadd.f32 %v864, %v937
    %v939 = vpop.f32.mrb[0].mxu0
    %940 = vdwg.mxu0
    %vm941 = vcmask 57344
    %942 = vst.msk [vmem:[#allocation3] sm:$0x1] %vm941, %v938
    // Predicated region
    $region34: #{critic_forward.1} parent=1 // pred_check
      _
    $region35: #{critic_forward.1} parent=1 // pred_check_branch
      %944 = sbr.rel (0) target = $region37
    $region36: #{critic_forward.1} parent=1 // pred_region
      %s946 = ssub.s32 16, 16
      %947 = vsyncadd [#allocation4], %s946
      %s949 = sshll.u32 [#allocation3], 4
      %s950 = int_to_ptr.vmem [resolvable:$true] %s949
      %952 = dma.vmem_to_hbm [thread:$0]  %s950, 16, %s8, [#allocation4]
    $region37: #{critic_forward.1} parent=1 // pred_fallthru
      _
    // Predicated region
    $region38: #{critic_forward.1} parent=1 // pred_check
      _
    $region39: #{critic_forward.1} parent=1 // pred_check_branch
      %954 = sbr.rel (0) target = $region41
    $region40: #{critic_forward.1} parent=1 // pred_region
      %955 = dma.done [#allocation4], 16
    $region41: #{critic_forward.1} parent=1 // pred_fallthru
      _
    %956 = vsyncpa [#allocation4], 1

</llo_original>
